<compile_context>
chip_gen: v7x
topology: tpu7x:2x2x1
jax: 0.10.0
libtpu: 0.0.40
codegen_flags: <defaults>
</compile_context>

<pallas_src>
import math

import jax
import jax.numpy as jnp
from jax.experimental import pallas as pl
from jax.experimental.pallas import tpu as pltpu

_LN_EPS = 1e-5


def _ln_pe_kernel(x_ref, gamma_ref, beta_ref, pe_ref, o_ref):
    """Fused LayerNorm(last dim) + affine + positional-encoding add.

    Block shapes:
      x_ref, o_ref : (1, tq, D)
      gamma_ref    : (1, D)   constant block index -> fetched once
      beta_ref     : (1, D)   constant block index -> fetched once
      pe_ref       : (tq, D)  constant over the inner (batch) grid axis
    """
    x = x_ref[0].astype(jnp.float32)                    # (tq, D)
    mean = jnp.mean(x, axis=-1, keepdims=True)
    xc = x - mean
    var = jnp.mean(xc * xc, axis=-1, keepdims=True)     # biased var (PyTorch LN)
    xhat = xc * jax.lax.rsqrt(var + _LN_EPS)
    y = (xhat * gamma_ref[...].astype(jnp.float32)
         + beta_ref[...].astype(jnp.float32)
         + pe_ref[...].astype(jnp.float32))
    o_ref[0] = y.astype(o_ref.dtype)
    # TODO(synk): dropout omitted -- identity in inference/eval mode.


def make_positional_encoding(max_len, d_model, dtype=jnp.float32):
    """Same buffer as PositionalEncoding.extend_pe (sin on even, cos on odd cols)."""
    position = jnp.arange(max_len, dtype=jnp.float32)[:, None]            # (L, 1)
    div_term = jnp.exp(
        jnp.arange(0, d_model, 2, dtype=jnp.float32)
        * -(math.log(10000.0) / d_model)
    )                                                                      # (D/2,)
    angles = position * div_term                                           # (L, D/2)
    pe = jnp.stack([jnp.sin(angles), jnp.cos(angles)], axis=-1)            # (L, D/2, 2)
    return pe.reshape(max_len, d_model).astype(dtype)                      # interleave


def _sublane_rows(dtype):
    return {4: 8, 2: 16, 1: 32}.get(jnp.dtype(dtype).itemsize, 8)


def _tpu_budget():
    """(target block bytes, vmem-limit cap) tuned per TPU generation."""
    try:
        vmem = int(pltpu.get_tpu_info().vmem_capacity_bytes)
    except Exception:            # older jax / no info -> conservative (v7x-like)
        vmem = 64 << 20
    # v5e/v6e (128 MiB physical): 4 MiB tiles; v7x (64 MiB physical): 2 MiB.
    target = int(min(4 << 20, max(2 << 20, vmem // 32)))
    cap = int(min(96 << 20, vmem * 3 // 4))
    return target, cap


def layernorm_positional_encoding(x, gamma, beta, pe, *, tq=None,
                                  target_block_bytes=None):
    """x: (B, T, D); gamma/beta: (D,); pe: (max_len, D) with max_len >= T."""
    B, T, D = x.shape
    assert gamma.shape == (D,) and beta.shape == (D,)
    assert pe.ndim == 2 and pe.shape[1] == D and pe.shape[0] >= T

    sub = _sublane_rows(x.dtype)
    itemsize = jnp.dtype(x.dtype).itemsize
    default_target, vmem_cap = _tpu_budget()
    if target_block_bytes is None:
        target_block_bytes = default_target

    pe_op = pe                      # full buffer: only referenced blocks are DMA'd
    if tq is None:
        if T < sub:
            tq = T                  # single full-extent time block
        else:
            rows = (target_block_bytes // max(1, D * itemsize)) // sub * sub
            tq = int(min(max(sub, rows), (T // sub) * sub))
            if B == 1 and T >= 2 * sub:
                # Ensure >= 2 time blocks so both v7x TensorCores get work.
                half = (((T + 1) // 2) + sub - 1) // sub * sub
                tq = max(sub, min(tq, half))
    tq = int(tq)
    if tq % sub != 0:
        # A time block that isn't a multiple of the sublane count is only legal
        # when it spans the full time extent of every operand (tiny-T case).
        assert tq == T, f"tq={tq} must be a multiple of {sub} or equal T={T}"
        pe_op = pe[:T]              # tiny copy; only taken when T < sublane count
    nt = pl.cdiv(T, tq)             # masked edge block handles T % tq != 0

    # 3 tq-sized streams (x, pe, out) x 2 pipeline buffers + f32 temporaries.
    block_bytes = tq * D * itemsize
    vmem_need = 6 * block_bytes + 8 * tq * D * 4 + (4 << 20)
    vmem_limit = int(min(max(vmem_need, 32 << 20), vmem_cap))

    cost = pl.CostEstimate(
        flops=8 * B * T * D,
        transcendentals=B * T,                       # one rsqrt per row
        bytes_accessed=(2 * B * T * D + T * D) * itemsize
                       + 2 * D * jnp.dtype(gamma.dtype).itemsize,
    )

    gamma_op = gamma.reshape(1, D)
    beta_op = beta.reshape(1, D)

    return pl.pallas_call(
        _ln_pe_kernel,
        out_shape=jax.ShapeDtypeStruct((B, T, D), x.dtype),
        grid_spec=pltpu.PrefetchScalarGridSpec(
            num_scalar_prefetch=0,
            # time outer, batch inner: pe/gamma/beta block indices are constant
            # across the inner axis -> Pallas skips their redundant re-DMA.
            grid=(nt, B),
            in_specs=[
                pl.BlockSpec((1, tq, D), lambda t, b: (b, t, 0)),   # x
                pl.BlockSpec((1, D), lambda t, b: (0, 0)),          # gamma
                pl.BlockSpec((1, D), lambda t, b: (0, 0)),          # beta
                pl.BlockSpec((tq, D), lambda t, b: (t, 0)),         # pe
            ],
            out_specs=pl.BlockSpec((1, tq, D), lambda t, b: (b, t, 0)),
        ),
        compiler_params=pltpu.CompilerParams(
            dimension_semantics=("parallel", "parallel"),
            vmem_limit_bytes=vmem_limit,
        ),
        cost_estimate=cost,
    )(x, gamma_op, beta_op, pe_op)


def _reference(x, gamma, beta, pe):
    xf = x.astype(jnp.float32)
    mean = jnp.mean(xf, axis=-1, keepdims=True)
    var = jnp.mean((xf - mean) ** 2, axis=-1, keepdims=True)
    xhat = (xf - mean) * jax.lax.rsqrt(var + _LN_EPS)
    y = xhat * gamma + beta + pe[None, : x.shape[1]]
    return y.astype(x.dtype)


if __name__ == "__main__":
    # Small shapes consistent with the module's forward: (batch, time, d_model)
    B, T, D = 2, 8, 32
    max_len = 5000
    dropout_rate = 0.1  # unused: dropout is identity at inference

    key = jax.random.PRNGKey(0)
    kx, kg, kb = jax.random.split(key, 3)
    x = jax.random.normal(kx, (B, T, D), dtype=jnp.float32)

    # LayerNorm(d_model) params; PyTorch default is weight=1, bias=0 -- perturb
    # deterministically so the affine path is actually exercised.
    gamma = 1.0 + 0.1 * jax.random.normal(kg, (D,), dtype=jnp.float32)
    beta = 0.1 * jax.random.normal(kb, (D,), dtype=jnp.float32)

    pe = make_positional_encoding(max_len, D, dtype=x.dtype)

    out = layernorm_positional_encoding(x, gamma, beta, pe)
    out = jax.block_until_ready(out)

    ref = _reference(x, gamma, beta, pe)
    assert out.shape == (B, T, D)
    assert jnp.allclose(out, ref, atol=1e-5, rtol=1e-5), "mismatch vs reference"

    print("KERNEL_OK")
</pallas_src>

<mosaic_0001>
module attributes {stable_mosaic.version = 11 : i64} {
  func.func @_ln_pe_kernel(%arg0: i32, %arg1: i32, %arg2: memref<1x8x32xf32, #tpu.memory_space<vmem>>, %arg3: memref<1x32xf32, #tpu.memory_space<vmem>>, %arg4: memref<1x32xf32, #tpu.memory_space<vmem>>, %arg5: memref<8x32xf32, #tpu.memory_space<vmem>>, %arg6: memref<1x8x32xf32, #tpu.memory_space<vmem>>) attributes {dimension_semantics = [#tpu.dimension_semantics<parallel>, #tpu.dimension_semantics<parallel>], iteration_bounds = array<i64: 1, 2>, scalar_prefetch = 0 : i64, scratch_operands = 0 : i64, tpu.core_type = #tpu.core_type<tc>, window_params = [{transform_indices = @transform_0, window_bounds = array<i64: 1, 8, 32>}, {pipeline_mode = #tpu.pipeline_mode<synchronous>, transform_indices = @transform_1, window_bounds = array<i64: 1, 32>}, {pipeline_mode = #tpu.pipeline_mode<synchronous>, transform_indices = @transform_2, window_bounds = array<i64: 1, 32>}, {transform_indices = @transform_3, window_bounds = array<i64: 8, 32>}, {transform_indices = @transform_4, window_bounds = array<i64: 1, 8, 32>}]} {
    %c0 = arith.constant 0 : index
    %c0_0 = arith.constant 0 : index
    %c0_1 = arith.constant 0 : index
    %0 = vector.load %arg2[%c0, %c0_0, %c0_1] : memref<1x8x32xf32, #tpu.memory_space<vmem>>, vector<1x8x32xf32>
    %1 = vector.shape_cast %0 : vector<1x8x32xf32> to vector<8x32xf32>
    %cst = arith.constant dense<0.000000e+00> : vector<8xf32>
    %2 = vector.multi_reduction <add>, %1, %cst [1] : vector<8x32xf32> to vector<8xf32>
    %3 = vector.shape_cast %2 : vector<8xf32> to vector<8x1xf32>
    %cst_2 = arith.constant 3.200000e+01 : f32
    %4 = vector.broadcast %cst_2 : f32 to vector<8x1xf32>
    %5 = arith.divf %3, %4 : vector<8x1xf32>
    %6 = vector.broadcast %5 : vector<8x1xf32> to vector<8x32xf32>
    %7 = arith.subf %1, %6 : vector<8x32xf32>
    %8 = arith.mulf %7, %7 : vector<8x32xf32>
    %cst_3 = arith.constant dense<0.000000e+00> : vector<8xf32>
    %9 = vector.multi_reduction <add>, %8, %cst_3 [1] : vector<8x32xf32> to vector<8xf32>
    %10 = vector.shape_cast %9 : vector<8xf32> to vector<8x1xf32>
    %cst_4 = arith.constant 3.200000e+01 : f32
    %11 = vector.broadcast %cst_4 : f32 to vector<8x1xf32>
    %12 = arith.divf %10, %11 : vector<8x1xf32>
    %cst_5 = arith.constant 9.99999974E-6 : f32
    %13 = vector.broadcast %cst_5 : f32 to vector<8x1xf32>
    %14 = arith.addf %12, %13 : vector<8x1xf32>
    %15 = math.rsqrt %14 : vector<8x1xf32>
    %16 = vector.broadcast %15 : vector<8x1xf32> to vector<8x32xf32>
    %17 = arith.mulf %7, %16 : vector<8x32xf32>
    %c0_6 = arith.constant 0 : index
    %c0_7 = arith.constant 0 : index
    %18 = vector.load %arg3[%c0_6, %c0_7] : memref<1x32xf32, #tpu.memory_space<vmem>>, vector<1x32xf32>
    %19 = vector.broadcast %18 : vector<1x32xf32> to vector<8x32xf32>
    %20 = arith.mulf %17, %19 : vector<8x32xf32>
    %c0_8 = arith.constant 0 : index
    %c0_9 = arith.constant 0 : index
    %21 = vector.load %arg4[%c0_8, %c0_9] : memref<1x32xf32, #tpu.memory_space<vmem>>, vector<1x32xf32>
    %22 = vector.broadcast %21 : vector<1x32xf32> to vector<8x32xf32>
    %23 = arith.addf %20, %22 : vector<8x32xf32>
    %c0_10 = arith.constant 0 : index
    %c0_11 = arith.constant 0 : index
    %24 = vector.load %arg5[%c0_10, %c0_11] : memref<8x32xf32, #tpu.memory_space<vmem>>, vector<8x32xf32>
    %25 = arith.addf %23, %24 : vector<8x32xf32>
    %c0_12 = arith.constant 0 : index
    %c0_13 = arith.constant 0 : index
    %c0_14 = arith.constant 0 : index
    %26 = vector.load %arg6[%c0_12, %c0_13, %c0_14] : memref<1x8x32xf32, #tpu.memory_space<vmem>>, vector<1x8x32xf32>
    %27 = vector.shape_cast %26 : vector<1x8x32xf32> to vector<8x32xf32>
    %28 = vector.shape_cast %25 : vector<8x32xf32> to vector<1x8x32xf32>
    tpu.vector_store %arg6[%c0_12, %c0_13, %c0_14], %28 {strides = array<i32>} : memref<1x8x32xf32, #tpu.memory_space<vmem>>, vector<1x8x32xf32>,
    return
  }
  func.func @transform_0(%arg0: i32, %arg1: i32) -> (i32, i32, i32) {
    %c0_i32 = arith.constant 0 : i32
    %c0_i32_0 = arith.constant 0 : i32
    return %arg1, %arg0, %c0_i32 : i32, i32, i32
  }
  func.func @transform_1(%arg0: i32, %arg1: i32) -> (i32, i32) {
    %c0_i32 = arith.constant 0 : i32
    %c0_i32_0 = arith.constant 0 : i32
    %c0_i32_1 = arith.constant 0 : i32
    return %c0_i32, %c0_i32_0 : i32, i32
  }
  func.func @transform_2(%arg0: i32, %arg1: i32) -> (i32, i32) {
    %c0_i32 = arith.constant 0 : i32
    %c0_i32_0 = arith.constant 0 : i32
    %c0_i32_1 = arith.constant 0 : i32
    return %c0_i32, %c0_i32_0 : i32, i32
  }
  func.func @transform_3(%arg0: i32, %arg1: i32) -> (i32, i32) {
    %c0_i32 = arith.constant 0 : i32
    %c0_i32_0 = arith.constant 0 : i32
    return %arg0, %c0_i32 : i32, i32
  }
  func.func @transform_4(%arg0: i32, %arg1: i32) -> (i32, i32, i32) {
    %c0_i32 = arith.constant 0 : i32
    %c0_i32_0 = arith.constant 0 : i32
    return %arg1, %arg0, %c0_i32 : i32, i32, i32
  }
}

</mosaic_0001>

<llo_original>
// kernel: tpu_custom_call.1
$region0: #{tpu_custom_call.1}
  #allocation0 [shape = 'u32[]', space=smem, size = 0x4, offset = 0x4, fixed_abs, tag = 'smem constant byte address 0x4 - core index']
  #allocation1 [shape = 'u32[144,128]{1,0:T(1,128)}', space=vmem, size = 0x12000, scoped, tag = 'internal scratch']
  %s0 = inlined_call_operand.vmem [shape: f32[2,8,32], index: 0, kind: input, shape index: {}]
  %s1 = inlined_call_operand.vmem [shape: f32[1,32], index: 1, kind: input, shape index: {}]
  %s2 = inlined_call_operand.vmem [shape: f32[1,32], index: 2, kind: input, shape index: {}]
  %s3 = inlined_call_operand.vmem [shape: f32[5000,32], index: 3, kind: input, shape index: {}]
  %s4 = inlined_call_operand.hbm [shape: f32[2,8,32], index: 4, kind: output, shape index: {}]
  %s5 = sld [smem:[#allocation0]]
  $region49: #{tpu_custom_call.1} parent=0
    _
  %s7 = ssub.s32 1, %s5
  %s8 = scalar_select 0, %s7, %s5
  $region1: #{tpu_custom_call.1} parent=0
    #allocation2 [shape = 'u8[8192]{0}', space=vmem, size = 0x2000, scoped, tag = 'output window, operand 0']
    #allocation3 [shape = 's32[2]{0}', space=sflag, size = 0x8, scoped, tag = 'scoped memory for tpu_custom_call.1']
    %9 = vsyncpa [#allocation3], 0
    %s10 = scalar_lea.sflag [#allocation3], 1
    %11 = vsyncpa %s10, 0
    loop: start=0, step=1, limit=4
    $region2: #{tpu_custom_call.1} parent=1 // loop_pre_header
      _
    $region3: #{tpu_custom_call.1} parent=1 // loop_header
      %s13 = sphi 0, %s17
      %p14 = scmp.ge.s32.totalorder %s13, 4
      %s20 = sphi 0, %s32
      %s21 = sphi 0, %s28
      %s22 = sphi 0, %s20
      %s23 = sphi 0, %s21
      %s24 = sphi 0, %s22
      %s25 = sphi 0, %s23
      %s37 = sphi 0, %s39
      %s40 = sphi 0, %s37
      %s41 = sphi 0, %s40
      %s57 = sphi 0, %s41
      %s61 = sphi 0, %s61
      %s63 = sphi 0, %s61
      %s64 = sphi 0, %s63
      %s78 = sphi 0, %s64
      %s82 = sphi 0, %s82
      %s84 = sphi 0, %s82
      %s85 = sphi 0, %s84
      %s99 = sphi 0, %s85
      %s105 = sphi 0, %s107
      %s108 = sphi 0, %s105
      %s109 = sphi 0, %s108
      %s125 = sphi 0, %s109
      %s133 = sphi 0, %s135
      %s136 = sphi 0, %s133
      %s137 = sphi 0, %s136
      %s153 = sphi 0, %s137
    $region4: #{tpu_custom_call.1} parent=1 // loop_header_branch
      %16 = sbr.rel (%p14) target = $region8
    $region5: #{tpu_custom_call.1} parent=1 // loop_body
      %s18 = ssub.s32 %s13, 1
      %s19 = ssub.s32 %s13, 2
      %s26 = sadd.s32 1, %s21
      %p27 = scmp.ge.s32.totalorder %s26, 2
      %s28 = scalar_select %p27, 0, %s26
      %s29 = sadd.s32 1, %s20
      %s30 = scalar_select %p27, %s29, %s20
      %p31 = scmp.ge.s32.totalorder %s30, 1
      %s32 = scalar_select %p31, 0, %s30
      %s33 = ssub.s32 %s21, %s28
      %s34 = ssub.s32 %s20, %s32
      %s35 = sor.u32 %s33, %s34
      %p36 = scmp.eq.s32.totalorder %s35, 0
      %s38 = sadd.s32 %s37, 1
      %s39 = scalar_select %p36, %s37, %s38
      %p42 = pneg %p36
      %p43 = scmp.eq.s32.totalorder %s13, 1
      %p44 = por %p42, %p43
      %p45 = scmp.ne.s32.totalorder %s37, %s40
      %p46 = scmp.eq.s32.totalorder %s13, 0
      %p47 = por %p45, %p46
      %p48 = scmp.ne.s32.totalorder %s37, %s40
      %p49 = scmp.eq.s32.totalorder %s18, 1
      %p50 = por %p48, %p49
      %p51 = scmp.ne.s32.totalorder %s40, %s41
      %p52 = scmp.eq.s32.totalorder %s18, 0
      %p53 = por %p51, %p52
      %p54 = scmp.ne.s32.totalorder %s40, %s41
      %p55 = scmp.eq.s32.totalorder %s19, 1
      %p56 = por %p54, %p55
      %p58 = scmp.ne.s32.totalorder %s41, %s57
      %p59 = scmp.eq.s32.totalorder %s19, 0
      %p60 = por %p58, %p59
      %s62 = sadd.s32 %s61, 1
      %p65 = scmp.eq.s32.totalorder %s13, 1
      %p66 = scmp.ne.s32.totalorder %s61, %s63
      %p67 = scmp.eq.s32.totalorder %s13, 0
      %p68 = por %p66, %p67
      %p69 = scmp.ne.s32.totalorder %s61, %s63
      %p70 = scmp.eq.s32.totalorder %s18, 1
      %p71 = por %p69, %p70
      %p72 = scmp.ne.s32.totalorder %s63, %s64
      %p73 = scmp.eq.s32.totalorder %s18, 0
      %p74 = por %p72, %p73
      %p75 = scmp.ne.s32.totalorder %s63, %s64
      %p76 = scmp.eq.s32.totalorder %s19, 1
      %p77 = por %p75, %p76
      %p79 = scmp.ne.s32.totalorder %s64, %s78
      %p80 = scmp.eq.s32.totalorder %s19, 0
      %p81 = por %p79, %p80
      %s83 = sadd.s32 %s82, 1
      %p86 = scmp.eq.s32.totalorder %s13, 1
      %p87 = scmp.ne.s32.totalorder %s82, %s84
      %p88 = scmp.eq.s32.totalorder %s13, 0
      %p89 = por %p87, %p88
      %p90 = scmp.ne.s32.totalorder %s82, %s84
      %p91 = scmp.eq.s32.totalorder %s18, 1
      %p92 = por %p90, %p91
      %p93 = scmp.ne.s32.totalorder %s84, %s85
      %p94 = scmp.eq.s32.totalorder %s18, 0
      %p95 = por %p93, %p94
      %p96 = scmp.ne.s32.totalorder %s84, %s85
      %p97 = scmp.eq.s32.totalorder %s19, 1
      %p98 = por %p96, %p97
      %p100 = scmp.ne.s32.totalorder %s85, %s99
      %p101 = scmp.eq.s32.totalorder %s19, 0
      %p102 = por %p100, %p101
      %s103 = ssub.s32 %s20, %s32
      %p104 = scmp.eq.s32.totalorder %s103, 0
      %s106 = sadd.s32 %s105, 1
      %s107 = scalar_select %p104, %s105, %s106
      %p110 = pneg %p104
      %p111 = scmp.eq.s32.totalorder %s13, 1
      %p112 = por %p110, %p111
      %p113 = scmp.ne.s32.totalorder %s105, %s108
      %p114 = scmp.eq.s32.totalorder %s13, 0
      %p115 = por %p113, %p114
      %p116 = scmp.ne.s32.totalorder %s105, %s108
      %p117 = scmp.eq.s32.totalorder %s18, 1
      %p118 = por %p116, %p117
      %p119 = scmp.ne.s32.totalorder %s108, %s109
      %p120 = scmp.eq.s32.totalorder %s18, 0
      %p121 = por %p119, %p120
      %p122 = scmp.ne.s32.totalorder %s108, %s109
      %p123 = scmp.eq.s32.totalorder %s19, 1
      %p124 = por %p122, %p123
      %p126 = scmp.ne.s32.totalorder %s109, %s125
      %p127 = scmp.eq.s32.totalorder %s19, 0
      %p128 = por %p126, %p127
      %s129 = ssub.s32 %s21, %s28
      %s130 = ssub.s32 %s20, %s32
      %s131 = sor.u32 %s129, %s130
      %p132 = scmp.eq.s32.totalorder %s131, 0
      %s134 = sadd.s32 %s133, 1
      %s135 = scalar_select %p132, %s133, %s134
      %p138 = pneg %p132
      %p139 = scmp.eq.s32.totalorder %s13, 1
      %p140 = por %p138, %p139
      %p141 = scmp.ne.s32.totalorder %s133, %s136
      %p142 = scmp.eq.s32.totalorder %s13, 0
      %p143 = por %p141, %p142
      %p144 = scmp.ne.s32.totalorder %s133, %s136
      %p145 = scmp.eq.s32.totalorder %s18, 1
      %p146 = por %p144, %p145
      %p147 = scmp.ne.s32.totalorder %s136, %s137
      %p148 = scmp.eq.s32.totalorder %s18, 0
      %p149 = por %p147, %p148
      %p150 = scmp.ne.s32.totalorder %s136, %s137
      %p151 = scmp.eq.s32.totalorder %s19, 1
      %p152 = por %p150, %p151
      %p154 = scmp.ne.s32.totalorder %s137, %s153
      %p155 = scmp.eq.s32.totalorder %s19, 0
      %p156 = por %p154, %p155
      %p157 = scmp.le.s32.totalorder 1, %s13
      %p158 = scmp.lt.s32.totalorder %s13, 3
      %p159 = pnand %p157, %p158
      %p160 = pneg %p159
      // Predicated region
      $region9: #{tpu_custom_call.1} parent=5 // pred_check
        _
      $region10: #{tpu_custom_call.1} parent=5 // pred_check_branch
        %162 = sbr.rel (%p159) target = $region12
      $region11: #{tpu_custom_call.1} parent=5 // pred_region
        %s163 = ssub.s32 %s13, 1
        // Predicated region
        $region13: #{tpu_custom_call.1} parent=11 // pred_check
          %p164 = pneg %p74
        $region14: #{tpu_custom_call.1} parent=11 // pred_check_branch
          %166 = sbr.rel (%p164) target = $region16
        $region15: #{tpu_custom_call.1} parent=11 // pred_region
          _
        $region16: #{tpu_custom_call.1} parent=11 // pred_fallthru
          _
        // Predicated region
        $region17: #{tpu_custom_call.1} parent=11 // pred_check
          %p167 = pneg %p95
        $region18: #{tpu_custom_call.1} parent=11 // pred_check_branch
          %169 = sbr.rel (%p167) target = $region20
        $region19: #{tpu_custom_call.1} parent=11 // pred_region
          _
        $region20: #{tpu_custom_call.1} parent=11 // pred_fallthru
          _
        // Predicated region
        $region21: #{tpu_custom_call.1} parent=11 // pred_check
          %p170 = pneg %p121
        $region22: #{tpu_custom_call.1} parent=11 // pred_check_branch
          %172 = sbr.rel (%p170) target = $region24
        $region23: #{tpu_custom_call.1} parent=11 // pred_region
          %p173 = scmp.lt.s32.totalorder %s22, 624
          %s174 = scalar_select %p173, %s22, 624
          %s175 = smul.addr %s174, 8
          %s176 = scalar_lea.vmem %s3, %s175
        $region24: #{tpu_custom_call.1} parent=11 // pred_fallthru
          _
      $region12: #{tpu_custom_call.1} parent=5 // pred_fallthru
        _
      %p177 = scmp.lt.s32.totalorder %s13, 2
      // Predicated region
      $region25: #{tpu_custom_call.1} parent=5 // pred_check
        %p178 = pneg %p177
      $region26: #{tpu_custom_call.1} parent=5 // pred_check_branch
        %180 = sbr.rel (%p178) target = $region28
      $region27: #{tpu_custom_call.1} parent=5 // pred_region
        // Predicated region
        $region29: #{tpu_custom_call.1} parent=27 // pred_check
          %p181 = pneg %p47
        $region30: #{tpu_custom_call.1} parent=27 // pred_check_branch
          %183 = sbr.rel (%p181) target = $region32
        $region31: #{tpu_custom_call.1} parent=27 // pred_region
          %p184 = scmp.lt.s32.totalorder %s21, 1
          %s185 = scalar_select %p184, %s21, 1
          %p186 = scmp.lt.s32.totalorder %s20, 0
          %s187 = scalar_select %p186, %s20, 0
          %s188 = sadd.s32 %s187, %s185
          %s189 = smul.addr %s188, 8
          %s190 = scalar_lea.vmem %s0, %s189
        $region32: #{tpu_custom_call.1} parent=27 // pred_fallthru
          _
      $region28: #{tpu_custom_call.1} parent=5 // pred_fallthru
        _
      %p191 = scmp.le.s32.totalorder 1, %s13
      %p192 = scmp.lt.s32.totalorder %s13, 3
      %p193 = pnand %p191, %p192
      %p194 = pneg %p193
      // Predicated region
      $region33: #{tpu_custom_call.1} parent=5 // pred_check
        _
      $region34: #{tpu_custom_call.1} parent=5 // pred_check_branch
        %196 = sbr.rel (%p193) target = $region36
      $region35: #{tpu_custom_call.1} parent=5 // pred_region
        %s197 = ssub.s32 %s13, 1
        %p198 = scmp.lt.s32.totalorder %s23, 1
        %s199 = scalar_select %p198, %s23, 1
        %p200 = scmp.lt.s32.totalorder %s22, 0
        %s201 = scalar_select %p200, %s22, 0
        %s202 = sadd.s32 %s201, %s199
        %s203 = smul.addr %s202, 8
        %s204 = scalar_lea.vmem %s0, %s203
        %p205 = pneg %p53
        %p206 = pneg %p50
        %p207 = pneg %p74
        %p208 = pneg %p71
        %p209 = pneg %p95
        %p210 = pneg %p92
        %p211 = scmp.lt.s32.totalorder %s22, 624
        %s212 = scalar_select %p211, %s22, 624
        %s213 = smul.addr %s212, 8
        %s214 = scalar_lea.vmem %s3, %s213
        %p215 = pneg %p121
        %p216 = pneg %p118
        %p217 = pneg %p149
        %p218 = pneg %p146
        %s219 = sand.u32 %s136, 1
        %s220 = scalar_lea.sflag [#allocation3], %s219
        %s221 = sand.u32 %s136, 1
        %s222 = smul.addr %s221, 8
        %s223 = scalar_lea.vmem [#allocation2], %s222
        %p224 = scmp.lt.s32.totalorder %s23, 1
        %s225 = scalar_select %p224, %s23, 1
        %p226 = scmp.lt.s32.totalorder %s22, 0
        %s227 = scalar_select %p226, %s22, 0
        %s228 = sadd.s32 %s227, %s225
        %s229 = smul.addr %s228, 8
        %s230 = scalar_lea.vmem %s0, %s229
        %p231 = scmp.lt.s32.totalorder %s22, 624
        %s232 = scalar_select %p231, %s22, 624
        %s233 = smul.addr %s232, 8
        %s234 = scalar_lea.vmem %s3, %s233
        %v235 = vld [vmem:[%s230] sm:$0xff]
        %vm236 = vcmask 261120
        %v237 = vsel %vm236, %v235, 0.0
        %238 = vadd.xlane.f32.xlu0 %v237
        %v239 = vpop.xlane.xlu0 %238
        %v240 = vrcp.pop 32.0
        %v241 = vmul.f32 %v239, %v240
        %v242 = vsub.f32 %v235, %v241
        %v243 = vmul.f32 %v242, %v242
        %v244 = vsel %vm236, %v243, 0.0
        %245 = vadd.xlane.f32.xlu0 %v244
        %v246 = vpop.xlane.xlu0 %245
        %v247 = vmul.f32 %v246, %v240
        %v248 = vadd.f32 %v247, 1e-05
        %v249 = vrsqrt.pop %v248
        %v250 = vmul.f32 %v242, %v249
        %v251 = vld [vmem:[%s1] sm:$0x1]
        %v253 = vlaneseq
        %v254 = vshrl.u32 %v253, 7
        %v255 = vsub.s32 0, %v254
        %v256 = vrot.slane %v251, %v255
        %v258 = vmul.f32 %v250, %v256
        %v259 = vld [vmem:[%s2] sm:$0x1]
        %v261 = vlaneseq
        %v262 = vshrl.u32 %v261, 7
        %v263 = vsub.s32 0, %v262
        %v264 = vrot.slane %v259, %v263
        %v266 = vadd.f32 %v258, %v264
        %v267 = vld [vmem:[%s234] sm:$0xff]
        %v268 = vadd.f32 %v266, %v267
        %269 = vst.msk [vmem:[%s223] sm:$0xff] %vm236, %v268
        %s270 = sand.u32 %s136, 1
        %s271 = scalar_lea.sflag [#allocation3], %s270
        %s272 = sand.u32 %s136, 1
        %s273 = smul.addr %s272, 8
        %s274 = scalar_lea.vmem [#allocation2], %s273
        // Predicated region
        $region37: #{tpu_custom_call.1} parent=35 // pred_check
          %p275 = pneg %p146
        $region38: #{tpu_custom_call.1} parent=35 // pred_check_branch
          %277 = sbr.rel (%p275) target = $region40
        $region39: #{tpu_custom_call.1} parent=35 // pred_region
          %s279 = ssub.s32 128, 128
          %280 = vsyncadd %s271, %s279
          %s281 = sadd.s32 %s22, %s23
          %s282 = smul.addr %s281, 128
          %s283 = scalar_lea.hbm %s4, %s282
          %s285 = sshll.u32 %s274, 4
          %s286 = int_to_ptr.vmem [resolvable:$true] %s285
          %288 = dma.vmem_to_hbm [thread:$0]  %s286, 128, %s283, %s271
        $region40: #{tpu_custom_call.1} parent=35 // pred_fallthru
          _
      $region36: #{tpu_custom_call.1} parent=5 // pred_fallthru
        _
      %p289 = scmp.le.s32.totalorder 2, %s13
      // Predicated region
      $region41: #{tpu_custom_call.1} parent=5 // pred_check
        %p290 = pneg %p289
      $region42: #{tpu_custom_call.1} parent=5 // pred_check_branch
        %292 = sbr.rel (%p290) target = $region44
      $region43: #{tpu_custom_call.1} parent=5 // pred_region
        %s293 = ssub.s32 %s13, 2
        // Predicated region
        $region45: #{tpu_custom_call.1} parent=43 // pred_check
          %p294 = pneg %p152
        $region46: #{tpu_custom_call.1} parent=43 // pred_check_branch
          %296 = sbr.rel (%p294) target = $region48
        $region47: #{tpu_custom_call.1} parent=43 // pred_region
          %s297 = sand.u32 %s137, 1
          %s298 = scalar_lea.sflag [#allocation3], %s297
          %s299 = sand.u32 %s137, 1
          %s300 = smul.addr %s299, 8
          %s301 = scalar_lea.vmem [#allocation2], %s300
          %302 = dma.done %s298, 128
        $region48: #{tpu_custom_call.1} parent=43 // pred_fallthru
          _
      $region44: #{tpu_custom_call.1} parent=5 // pred_fallthru
        _
    $region6: #{tpu_custom_call.1} parent=1 // loop_footer
      %s17 = sadd.s32 1, %s13
    $region7: #{tpu_custom_call.1} parent=1 // loop_footer_branch
      %12 = sbr.rel target = $region3
    $region8: #{tpu_custom_call.1} parent=1 // loop_exit
      _
    %303 = vsyncpa [#allocation3], 1
    %s304 = scalar_lea.sflag [#allocation3], 1
    %305 = vsyncpa %s304, 1

</llo_original>
